<compile_context>
chip_gen: v7x
topology: tpu7x:2x2x1
jax: 0.10.0
libtpu: 0.0.40
codegen_flags: <defaults>
</compile_context>

<pallas_src>
import jax
import jax.numpy as jnp
from jax.experimental import pallas as pl
from jax.experimental.pallas import tpu as pltpu

LANE = 128  # TPU lane width: final-layer output is padded to a multiple of this.


def qnet_kernel(x_ref,
                w1_ref, b1_ref,
                w2_ref, b2_ref,
                w3_ref, b3_ref,
                w4_ref, b4_ref,
                w5_ref, b5_ref,
                o_ref):
    """Fused MLP: 5 Linear layers + activations on one batch tile (MXU dots, f32 acc)."""
    cdt = w1_ref.dtype  # compute dtype fed to the MXU (bf16 by default)

    def sigmoid(h):
        # sigmoid(x) == 0.5 * (tanh(x/2) + 1): single EUP transcendental, no divide
        # on the VALU critical path; hides under the MXU work.
        return 0.5 * (jnp.tanh(0.5 * h) + 1.0)

    x = x_ref[...].astype(cdt)

    # Linear(obs, 128) + ReLU
    h = jnp.dot(x, w1_ref[...], preferred_element_type=jnp.float32) + b1_ref[...]
    h = jnp.maximum(h, 0.0)

    # Linear(128, 256) + Sigmoid
    h = jnp.dot(h.astype(cdt), w2_ref[...], preferred_element_type=jnp.float32) + b2_ref[...]
    h = sigmoid(h)

    # Linear(256, 128) + Sigmoid
    h = jnp.dot(h.astype(cdt), w3_ref[...], preferred_element_type=jnp.float32) + b3_ref[...]
    h = sigmoid(h)

    # Linear(128, 128) + ReLU
    h = jnp.dot(h.astype(cdt), w4_ref[...], preferred_element_type=jnp.float32) + b4_ref[...]
    h = jnp.maximum(h, 0.0)

    # Linear(128, n_actions_padded) -- lane-dense (128-wide) output, unmasked stores.
    o_ref[...] = (jnp.dot(h.astype(cdt), w5_ref[...], preferred_element_type=jnp.float32)
                  + b5_ref[...]).astype(o_ref.dtype)


def _default_batch_tile(B):
    """Cap the batch tile so large batches run as a >=2-step grid (DMA/compute overlap)
    while every tile's (tile, 256) intermediates stay well inside scoped VMEM on
    v5e (16 MiB) / v6e (32 MiB) / v7x (64 MiB physical)."""
    for tile in (512, 256, 128):
        if B % tile == 0 and B > tile:
            return tile
    return B


def qnetwork_forward(x, params, *, batch_tile=None, compute_dtype=jnp.bfloat16):
    """Run the fused QNetwork forward. x: (B, obs_size) f32. Returns (B, n_actions) f32."""
    f32 = jnp.float32
    B, obs_size = x.shape
    n_actions = params["w5"].shape[1]

    if batch_tile is None:
        batch_tile = _default_batch_tile(B)
    assert B % batch_tile == 0, "batch must be divisible by batch_tile"
    assert batch_tile == B or batch_tile % 8 == 0, (
        "batch_tile must be a multiple of 8 (f32 sublane) unless it is the full batch")

    # Lane-dense output: zero-pad the last layer to a multiple of 128 lanes so the
    # output writeback is full-width vst (not masked 4-lane stores). Sliced back below.
    n_pad = ((n_actions + LANE - 1) // LANE) * LANE
    w5 = jnp.zeros((params["w5"].shape[0], n_pad), f32).at[:, :n_actions].set(params["w5"])
    b5 = jnp.zeros((1, n_pad), f32).at[:, :n_actions].set(params["b5"])

    weights = [params["w1"], params["w2"], params["w3"], params["w4"], w5]
    biases = [params["b1"], params["b2"], params["b3"], params["b4"], b5]
    weights = [w.astype(compute_dtype) for w in weights]   # bf16 -> MXU, half the DMA/VMEM
    biases = [b.astype(f32) for b in biases]               # f32 accumulation path

    # Weights/biases are tiny and their index_map is constant across the grid, so
    # Pallas fetches them once and keeps them resident in VMEM.
    def whole(a):
        return pl.BlockSpec(a.shape, lambda i: (0, 0))

    in_specs = [pl.BlockSpec((batch_tile, obs_size), lambda i: (i, 0))]  # x: batch-tiled
    flat_params = []
    for w, b in zip(weights, biases):
        in_specs += [whole(w), whole(b)]
        flat_params += [w, b]
    out_spec = pl.BlockSpec((batch_tile, n_pad), lambda i: (i, 0))

    param_bytes = sum(int(a.size) * a.dtype.itemsize for a in flat_params)
    cost = pl.CostEstimate(
        flops=2 * B * (obs_size * 128 + 128 * 256 + 256 * 128 + 128 * 128 + 128 * n_pad),
        transcendentals=B * (256 + 128),  # one tanh per sigmoid element
        bytes_accessed=int(x.size) * 4 + param_bytes + B * n_pad * 4,
    )

    out_padded = pl.pallas_call(
        qnet_kernel,
        out_shape=jax.ShapeDtypeStruct((B, n_pad), f32),
        grid_spec=pltpu.PrefetchScalarGridSpec(
            num_scalar_prefetch=0,
            grid=(B // batch_tile,),
            in_specs=in_specs,
            out_specs=out_spec,
        ),
        compiler_params=pltpu.CompilerParams(
            dimension_semantics=("parallel",)),
        cost_estimate=cost,
    )(x, *flat_params)

    return out_padded[:, :n_actions]


def init_params(key, obs_size, n_actions):
    """Deterministic init mirroring nn.Linear defaults: U(-1/sqrt(fan_in), 1/sqrt(fan_in)).
    Weights stored as (in, out) = PyTorch weight.T; biases as (1, out)."""
    dims = [(obs_size, 128), (128, 256), (256, 128), (128, 128), (128, n_actions)]
    params = {}
    for idx, (fan_in, fan_out) in enumerate(dims, start=1):
        key, kw, kb = jax.random.split(key, 3)
        bound = 1.0 / jnp.sqrt(jnp.float32(fan_in))
        params[f"w{idx}"] = jax.random.uniform(
            kw, (fan_in, fan_out), jnp.float32, -bound, bound)
        params[f"b{idx}"] = jax.random.uniform(
            kb, (1, fan_out), jnp.float32, -bound, bound)
    return params


def qnetwork_ref(x, params):
    """Pure-JAX f32 reference for correctness checking (matches the PyTorch module)."""
    h = jnp.maximum(x @ params["w1"] + params["b1"], 0.0)
    h = jax.nn.sigmoid(h @ params["w2"] + params["b2"])
    h = jax.nn.sigmoid(h @ params["w3"] + params["b3"])
    h = jnp.maximum(h @ params["w4"] + params["b4"], 0.0)
    return h @ params["w5"] + params["b5"]


if __name__ == "__main__":
    key = jax.random.PRNGKey(0)
    obs_size, n_actions = 16, 4

    kx, kx2, kp = jax.random.split(key, 3)
    params = init_params(kp, obs_size, n_actions)

    # 1) Small single-tile run in full f32 -> tight check vs the JAX reference.
    x_small = jax.random.normal(kx, (8, obs_size), jnp.float32)
    out_small = jax.block_until_ready(
        qnetwork_forward(x_small, params, compute_dtype=jnp.float32))
    ref_small = qnetwork_ref(x_small, params)
    assert out_small.shape == (8, n_actions)
    assert jnp.allclose(out_small, ref_small, atol=1e-4, rtol=1e-4), "f32 mismatch vs reference"

    # 2) Batch-tiled run (batch_tile=128 -> 2 grid steps) with default bf16 weights:
    #    exercises the pipelined path and the lane-dense padded output writeback.
    x_big = jax.random.normal(kx2, (256, obs_size), jnp.float32)
    out_big = jax.block_until_ready(qnetwork_forward(x_big, params))
    ref_big = qnetwork_ref(x_big, params)
    assert out_big.shape == (256, n_actions)
    assert jnp.allclose(out_big, ref_big, atol=1e-1, rtol=1e-1), "bf16 mismatch vs reference"

    print("KERNEL_OK")
</pallas_src>

<mosaic_0001>
module attributes {stable_mosaic.version = 11 : i64} {
  func.func @qnet_kernel(%arg0: i32, %arg1: memref<8x16xf32, #tpu.memory_space<vmem>>, %arg2: memref<16x128xf32, #tpu.memory_space<vmem>>, %arg3: memref<1x128xf32, #tpu.memory_space<vmem>>, %arg4: memref<128x256xf32, #tpu.memory_space<vmem>>, %arg5: memref<1x256xf32, #tpu.memory_space<vmem>>, %arg6: memref<256x128xf32, #tpu.memory_space<vmem>>, %arg7: memref<1x128xf32, #tpu.memory_space<vmem>>, %arg8: memref<128x128xf32, #tpu.memory_space<vmem>>, %arg9: memref<1x128xf32, #tpu.memory_space<vmem>>, %arg10: memref<128x128xf32, #tpu.memory_space<vmem>>, %arg11: memref<1x128xf32, #tpu.memory_space<vmem>>, %arg12: memref<8x128xf32, #tpu.memory_space<vmem>>) attributes {dimension_semantics = [#tpu.dimension_semantics<parallel>], iteration_bounds = array<i64: 1>, scalar_prefetch = 0 : i64, scratch_operands = 0 : i64, tpu.core_type = #tpu.core_type<tc>, window_params = [{transform_indices = @transform_0, window_bounds = array<i64: 8, 16>}, {pipeline_mode = #tpu.pipeline_mode<synchronous>, transform_indices = @transform_1, window_bounds = array<i64: 16, 128>}, {pipeline_mode = #tpu.pipeline_mode<synchronous>, transform_indices = @transform_2, window_bounds = array<i64: 1, 128>}, {pipeline_mode = #tpu.pipeline_mode<synchronous>, transform_indices = @transform_3, window_bounds = array<i64: 128, 256>}, {pipeline_mode = #tpu.pipeline_mode<synchronous>, transform_indices = @transform_4, window_bounds = array<i64: 1, 256>}, {pipeline_mode = #tpu.pipeline_mode<synchronous>, transform_indices = @transform_5, window_bounds = array<i64: 256, 128>}, {pipeline_mode = #tpu.pipeline_mode<synchronous>, transform_indices = @transform_6, window_bounds = array<i64: 1, 128>}, {pipeline_mode = #tpu.pipeline_mode<synchronous>, transform_indices = @transform_7, window_bounds = array<i64: 128, 128>}, {pipeline_mode = #tpu.pipeline_mode<synchronous>, transform_indices = @transform_8, window_bounds = array<i64: 1, 128>}, {pipeline_mode = #tpu.pipeline_mode<synchronous>, transform_indices = @transform_9, window_bounds = array<i64: 128, 128>}, {pipeline_mode = #tpu.pipeline_mode<synchronous>, transform_indices = @transform_10, window_bounds = array<i64: 1, 128>}, {transform_indices = @transform_11, window_bounds = array<i64: 8, 128>}]} {
    %c0 = arith.constant 0 : index
    %c0_0 = arith.constant 0 : index
    %0 = vector.load %arg1[%c0, %c0_0] : memref<8x16xf32, #tpu.memory_space<vmem>>, vector<8x16xf32>
    %c0_1 = arith.constant 0 : index
    %c0_2 = arith.constant 0 : index
    %1 = vector.load %arg2[%c0_1, %c0_2] : memref<16x128xf32, #tpu.memory_space<vmem>>, vector<16x128xf32>
    %cst = arith.constant dense<0.000000e+00> : vector<8x128xf32>
    %2 = tpu.matmul %0, %1, %cst {dimension_numbers = #tpu.dot_dimension_numbers<[1], [0], [0], [1], [0, 0, 1, 1], [], []>} : vector<8x16xf32>, vector<16x128xf32>, vector<8x128xf32> -> vector<8x128xf32>
    %c0_3 = arith.constant 0 : index
    %c0_4 = arith.constant 0 : index
    %3 = vector.load %arg3[%c0_3, %c0_4] : memref<1x128xf32, #tpu.memory_space<vmem>>, vector<1x128xf32>
    %4 = vector.broadcast %3 : vector<1x128xf32> to vector<8x128xf32>
    %5 = arith.addf %2, %4 : vector<8x128xf32>
    %cst_5 = arith.constant 0.000000e+00 : f32
    %6 = vector.broadcast %cst_5 : f32 to vector<8x128xf32>
    %7 = arith.maximumf %5, %6 : vector<8x128xf32>
    %c0_6 = arith.constant 0 : index
    %c0_7 = arith.constant 0 : index
    %8 = vector.load %arg4[%c0_6, %c0_7] : memref<128x256xf32, #tpu.memory_space<vmem>>, vector<128x256xf32>
    %cst_8 = arith.constant dense<0.000000e+00> : vector<8x256xf32>
    %9 = tpu.matmul %7, %8, %cst_8 {dimension_numbers = #tpu.dot_dimension_numbers<[1], [0], [0], [1], [0, 0, 1, 1], [], []>} : vector<8x128xf32>, vector<128x256xf32>, vector<8x256xf32> -> vector<8x256xf32>
    %c0_9 = arith.constant 0 : index
    %c0_10 = arith.constant 0 : index
    %10 = vector.load %arg5[%c0_9, %c0_10] : memref<1x256xf32, #tpu.memory_space<vmem>>, vector<1x256xf32>
    %11 = vector.broadcast %10 : vector<1x256xf32> to vector<8x256xf32>
    %12 = arith.addf %9, %11 : vector<8x256xf32>
    %cst_11 = arith.constant 5.000000e-01 : f32
    %13 = vector.broadcast %cst_11 : f32 to vector<8x256xf32>
    %14 = arith.mulf %13, %12 : vector<8x256xf32>
    %15 = math.tanh %14 : vector<8x256xf32>
    %cst_12 = arith.constant 1.000000e+00 : f32
    %16 = vector.broadcast %cst_12 : f32 to vector<8x256xf32>
    %17 = arith.addf %15, %16 : vector<8x256xf32>
    %cst_13 = arith.constant 5.000000e-01 : f32
    %18 = vector.broadcast %cst_13 : f32 to vector<8x256xf32>
    %19 = arith.mulf %18, %17 : vector<8x256xf32>
    %c0_14 = arith.constant 0 : index
    %c0_15 = arith.constant 0 : index
    %20 = vector.load %arg6[%c0_14, %c0_15] : memref<256x128xf32, #tpu.memory_space<vmem>>, vector<256x128xf32>
    %cst_16 = arith.constant dense<0.000000e+00> : vector<8x128xf32>
    %21 = tpu.matmul %19, %20, %cst_16 {dimension_numbers = #tpu.dot_dimension_numbers<[1], [0], [0], [1], [0, 0, 1, 1], [], []>} : vector<8x256xf32>, vector<256x128xf32>, vector<8x128xf32> -> vector<8x128xf32>
    %c0_17 = arith.constant 0 : index
    %c0_18 = arith.constant 0 : index
    %22 = vector.load %arg7[%c0_17, %c0_18] : memref<1x128xf32, #tpu.memory_space<vmem>>, vector<1x128xf32>
    %23 = vector.broadcast %22 : vector<1x128xf32> to vector<8x128xf32>
    %24 = arith.addf %21, %23 : vector<8x128xf32>
    %cst_19 = arith.constant 5.000000e-01 : f32
    %25 = vector.broadcast %cst_19 : f32 to vector<8x128xf32>
    %26 = arith.mulf %25, %24 : vector<8x128xf32>
    %27 = math.tanh %26 : vector<8x128xf32>
    %cst_20 = arith.constant 1.000000e+00 : f32
    %28 = vector.broadcast %cst_20 : f32 to vector<8x128xf32>
    %29 = arith.addf %27, %28 : vector<8x128xf32>
    %cst_21 = arith.constant 5.000000e-01 : f32
    %30 = vector.broadcast %cst_21 : f32 to vector<8x128xf32>
    %31 = arith.mulf %30, %29 : vector<8x128xf32>
    %c0_22 = arith.constant 0 : index
    %c0_23 = arith.constant 0 : index
    %32 = vector.load %arg8[%c0_22, %c0_23] : memref<128x128xf32, #tpu.memory_space<vmem>>, vector<128x128xf32>
    %cst_24 = arith.constant dense<0.000000e+00> : vector<8x128xf32>
    %33 = tpu.matmul %31, %32, %cst_24 {dimension_numbers = #tpu.dot_dimension_numbers<[1], [0], [0], [1], [0, 0, 1, 1], [], []>} : vector<8x128xf32>, vector<128x128xf32>, vector<8x128xf32> -> vector<8x128xf32>
    %c0_25 = arith.constant 0 : index
    %c0_26 = arith.constant 0 : index
    %34 = vector.load %arg9[%c0_25, %c0_26] : memref<1x128xf32, #tpu.memory_space<vmem>>, vector<1x128xf32>
    %35 = vector.broadcast %34 : vector<1x128xf32> to vector<8x128xf32>
    %36 = arith.addf %33, %35 : vector<8x128xf32>
    %cst_27 = arith.constant 0.000000e+00 : f32
    %37 = vector.broadcast %cst_27 : f32 to vector<8x128xf32>
    %38 = arith.maximumf %36, %37 : vector<8x128xf32>
    %c0_28 = arith.constant 0 : index
    %c0_29 = arith.constant 0 : index
    %39 = vector.load %arg10[%c0_28, %c0_29] : memref<128x128xf32, #tpu.memory_space<vmem>>, vector<128x128xf32>
    %cst_30 = arith.constant dense<0.000000e+00> : vector<8x128xf32>
    %40 = tpu.matmul %38, %39, %cst_30 {dimension_numbers = #tpu.dot_dimension_numbers<[1], [0], [0], [1], [0, 0, 1, 1], [], []>} : vector<8x128xf32>, vector<128x128xf32>, vector<8x128xf32> -> vector<8x128xf32>
    %c0_31 = arith.constant 0 : index
    %c0_32 = arith.constant 0 : index
    %41 = vector.load %arg11[%c0_31, %c0_32] : memref<1x128xf32, #tpu.memory_space<vmem>>, vector<1x128xf32>
    %42 = vector.broadcast %41 : vector<1x128xf32> to vector<8x128xf32>
    %43 = arith.addf %40, %42 : vector<8x128xf32>
    %c0_33 = arith.constant 0 : index
    %c0_34 = arith.constant 0 : index
    %44 = vector.load %arg12[%c0_33, %c0_34] : memref<8x128xf32, #tpu.memory_space<vmem>>, vector<8x128xf32>
    tpu.vector_store %arg12[%c0_33, %c0_34], %43 {strides = array<i32>} : memref<8x128xf32, #tpu.memory_space<vmem>>, vector<8x128xf32>,
    return
  }
  func.func @transform_0(%arg0: i32) -> (i32, i32) {
    %c0_i32 = arith.constant 0 : i32
    %c0_i32_0 = arith.constant 0 : i32
    return %arg0, %c0_i32 : i32, i32
  }
  func.func @transform_1(%arg0: i32) -> (i32, i32) {
    %c0_i32 = arith.constant 0 : i32
    %c0_i32_0 = arith.constant 0 : i32
    %c0_i32_1 = arith.constant 0 : i32
    return %c0_i32, %c0_i32_0 : i32, i32
  }
  func.func @transform_2(%arg0: i32) -> (i32, i32) {
    %c0_i32 = arith.constant 0 : i32
    %c0_i32_0 = arith.constant 0 : i32
    %c0_i32_1 = arith.constant 0 : i32
    return %c0_i32, %c0_i32_0 : i32, i32
  }
  func.func @transform_3(%arg0: i32) -> (i32, i32) {
    %c0_i32 = arith.constant 0 : i32
    %c0_i32_0 = arith.constant 0 : i32
    %c0_i32_1 = arith.constant 0 : i32
    return %c0_i32, %c0_i32_0 : i32, i32
  }
  func.func @transform_4(%arg0: i32) -> (i32, i32) {
    %c0_i32 = arith.constant 0 : i32
    %c0_i32_0 = arith.constant 0 : i32
    %c0_i32_1 = arith.constant 0 : i32
    return %c0_i32, %c0_i32_0 : i32, i32
  }
  func.func @transform_5(%arg0: i32) -> (i32, i32) {
    %c0_i32 = arith.constant 0 : i32
    %c0_i32_0 = arith.constant 0 : i32
    %c0_i32_1 = arith.constant 0 : i32
    return %c0_i32, %c0_i32_0 : i32, i32
  }
  func.func @transform_6(%arg0: i32) -> (i32, i32) {
    %c0_i32 = arith.constant 0 : i32
    %c0_i32_0 = arith.constant 0 : i32
    %c0_i32_1 = arith.constant 0 : i32
    return %c0_i32, %c0_i32_0 : i32, i32
  }
  func.func @transform_7(%arg0: i32) -> (i32, i32) {
    %c0_i32 = arith.constant 0 : i32
    %c0_i32_0 = arith.constant 0 : i32
    %c0_i32_1 = arith.constant 0 : i32
    return %c0_i32, %c0_i32_0 : i32, i32
  }
  func.func @transform_8(%arg0: i32) -> (i32, i32) {
    %c0_i32 = arith.constant 0 : i32
    %c0_i32_0 = arith.constant 0 : i32
    %c0_i32_1 = arith.constant 0 : i32
    return %c0_i32, %c0_i32_0 : i32, i32
  }
  func.func @transform_9(%arg0: i32) -> (i32, i32) {
    %c0_i32 = arith.constant 0 : i32
    %c0_i32_0 = arith.constant 0 : i32
    %c0_i32_1 = arith.constant 0 : i32
    return %c0_i32, %c0_i32_0 : i32, i32
  }
  func.func @transform_10(%arg0: i32) -> (i32, i32) {
    %c0_i32 = arith.constant 0 : i32
    %c0_i32_0 = arith.constant 0 : i32
    %c0_i32_1 = arith.constant 0 : i32
    return %c0_i32, %c0_i32_0 : i32, i32
  }
  func.func @transform_11(%arg0: i32) -> (i32, i32) {
    %c0_i32 = arith.constant 0 : i32
    %c0_i32_0 = arith.constant 0 : i32
    return %arg0, %c0_i32 : i32, i32
  }
}

</mosaic_0001>

<llo_original>
// kernel: tpu_custom_call.1
$region0: #{tpu_custom_call.1}
  #allocation0 [shape = 'u32[]', space=smem, size = 0x4, offset = 0x4, fixed_abs, tag = 'smem constant byte address 0x4 - core index']
  #allocation1 [shape = 'u32[144,128]{1,0:T(1,128)}', space=vmem, size = 0x12000, scoped, tag = 'internal scratch']
  %s0 = inlined_call_operand.hbm [shape: f32[8,16], index: 0, kind: input, shape index: {}]
  %s1 = inlined_call_operand.hbm [shape: f32[16,128], index: 1, kind: input, shape index: {}]
  %s2 = inlined_call_operand.vmem [shape: f32[1,128], index: 2, kind: input, shape index: {}]
  %s3 = inlined_call_operand.hbm [shape: f32[128,256], index: 3, kind: input, shape index: {}]
  %s4 = inlined_call_operand.vmem [shape: f32[1,256], index: 4, kind: input, shape index: {}]
  %s5 = inlined_call_operand.hbm [shape: f32[256,128], index: 5, kind: input, shape index: {}]
  %s6 = inlined_call_operand.vmem [shape: f32[1,128], index: 6, kind: input, shape index: {}]
  %s7 = inlined_call_operand.hbm [shape: f32[128,128], index: 7, kind: input, shape index: {}]
  %s8 = inlined_call_operand.vmem [shape: f32[1,128], index: 8, kind: input, shape index: {}]
  %s9 = inlined_call_operand.hbm [shape: f32[128,128], index: 9, kind: input, shape index: {}]
  %s10 = inlined_call_operand.vmem [shape: f32[1,128], index: 10, kind: input, shape index: {}]
  %s11 = inlined_call_operand.hbm [shape: f32[8,128], index: 11, kind: output, shape index: {}]
  %s12 = sld [smem:[#allocation0]]
  $region78: #{tpu_custom_call.1} parent=0
    _
  %s14 = ssub.s32 1, %s12
  %s15 = scalar_select 0, %s14, %s12
  $region1: #{tpu_custom_call.1} parent=0
    #allocation2 [shape = 'u8[4096]{0}', space=vmem, size = 0x1000, scoped, tag = 'input window, operand 0, single buffered']
    #allocation3 [shape = 's32[1]{0}', space=sflag, size = 0x4, scoped, tag = 'scoped memory for tpu_custom_call.1']
    #allocation4 [shape = 's32[1]{0}', space=sflag, size = 0x4, scoped, tag = 'scoped memory for tpu_custom_call.1']
    #allocation5 [shape = 'u8[8192]{0}', space=vmem, size = 0x2000, scoped, tag = 'input window, operand 1, single buffered']
    #allocation6 [shape = 's32[1]{0}', space=sflag, size = 0x4, scoped, tag = 'scoped memory for tpu_custom_call.1']
    #allocation7 [shape = 'u8[131072]{0}', space=vmem, size = 0x20000, scoped, tag = 'input window, operand 3, single buffered']
    #allocation8 [shape = 'u8[131072]{0}', space=vmem, size = 0x20000, scoped, tag = 'input window, operand 5, single buffered']
    #allocation9 [shape = 's32[1]{0}', space=sflag, size = 0x4, scoped, tag = 'scoped memory for tpu_custom_call.1']
    #allocation10 [shape = 'u8[65536]{0}', space=vmem, size = 0x10000, scoped, tag = 'input window, operand 7, single buffered']
    #allocation11 [shape = 'u8[65536]{0}', space=vmem, size = 0x10000, scoped, tag = 'input window, operand 9, single buffered']
    #allocation12 [shape = 's32[1]{0}', space=sflag, size = 0x4, scoped, tag = 'scoped memory for tpu_custom_call.1']
    #allocation13 [shape = 'u8[4096]{0}', space=vmem, size = 0x1000, scoped, tag = 'output window, operand 0, single buffered']
    %16 = vsyncpa [#allocation3], 0
    %17 = vsyncpa [#allocation6], 0
    %18 = vsyncpa [#allocation9], 0
    %19 = vsyncpa [#allocation12], 0
    %20 = vsyncpa [#allocation4], 0
    // Predicated region
    $region2: #{tpu_custom_call.1} parent=1 // pred_check
      _
    $region3: #{tpu_custom_call.1} parent=1 // pred_check_branch
      %22 = sbr.rel (0) target = $region5
    $region4: #{tpu_custom_call.1} parent=1 // pred_region
      %s24 = ssub.s32 128, 128
      %25 = vsyncadd [#allocation3], %s24
      %s27 = sshll.u32 [#allocation2], 4
      %s28 = int_to_ptr.vmem [resolvable:$true] %s27
      %30 = dma.hbm_to_vmem [thread:$0]  %s0, 128, %s28, [#allocation3]
    $region5: #{tpu_custom_call.1} parent=1 // pred_fallthru
      _
    // Predicated region
    $region6: #{tpu_custom_call.1} parent=1 // pred_check
      _
    $region7: #{tpu_custom_call.1} parent=1 // pred_check_branch
      %32 = sbr.rel (0) target = $region9
    $region8: #{tpu_custom_call.1} parent=1 // pred_region
      %s34 = ssub.s32 256, 256
      %35 = vsyncadd [#allocation6], %s34
      %s36 = sshll.u32 [#allocation5], 4
      %s37 = int_to_ptr.vmem [resolvable:$true] %s36
      %42 = dma.hbm_to_vmem [thread:$0]  %s1, 256, %s37, [#allocation6], 128, 128, 8
    $region9: #{tpu_custom_call.1} parent=1 // pred_fallthru
      _
    // Predicated region
    $region10: #{tpu_custom_call.1} parent=1 // pred_check
      _
    $region11: #{tpu_custom_call.1} parent=1 // pred_check_branch
      %44 = sbr.rel (0) target = $region13
    $region12: #{tpu_custom_call.1} parent=1 // pred_region
      _
    $region13: #{tpu_custom_call.1} parent=1 // pred_fallthru
      _
    // Predicated region
    $region14: #{tpu_custom_call.1} parent=1 // pred_check
      _
    $region15: #{tpu_custom_call.1} parent=1 // pred_check_branch
      %46 = sbr.rel (0) target = $region17
    $region16: #{tpu_custom_call.1} parent=1 // pred_region
      %s48 = ssub.s32 4096, 4096
      %49 = vsyncadd [#allocation6], %s48
      %s50 = sshll.u32 [#allocation7], 4
      %s51 = int_to_ptr.vmem [resolvable:$true] %s50
      %56 = dma.hbm_to_vmem [thread:$0]  %s3, 4096, %s51, [#allocation6], 256, 256, 16
    $region17: #{tpu_custom_call.1} parent=1 // pred_fallthru
      _
    // Predicated region
    $region18: #{tpu_custom_call.1} parent=1 // pred_check
      _
    $region19: #{tpu_custom_call.1} parent=1 // pred_check_branch
      %58 = sbr.rel (0) target = $region21
    $region20: #{tpu_custom_call.1} parent=1 // pred_region
      _
    $region21: #{tpu_custom_call.1} parent=1 // pred_fallthru
      _
    // Predicated region
    $region22: #{tpu_custom_call.1} parent=1 // pred_check
      _
    $region23: #{tpu_custom_call.1} parent=1 // pred_check_branch
      %60 = sbr.rel (0) target = $region25
    $region24: #{tpu_custom_call.1} parent=1 // pred_region
      %s62 = ssub.s32 4096, 4096
      %63 = vsyncadd [#allocation9], %s62
      %s64 = sshll.u32 [#allocation8], 4
      %s65 = int_to_ptr.vmem [resolvable:$true] %s64
      %70 = dma.hbm_to_vmem [thread:$0]  %s5, 4096, %s65, [#allocation9], 128, 128, 8
    $region25: #{tpu_custom_call.1} parent=1 // pred_fallthru
      _
    // Predicated region
    $region26: #{tpu_custom_call.1} parent=1 // pred_check
      _
    $region27: #{tpu_custom_call.1} parent=1 // pred_check_branch
      %72 = sbr.rel (0) target = $region29
    $region28: #{tpu_custom_call.1} parent=1 // pred_region
      _
    $region29: #{tpu_custom_call.1} parent=1 // pred_fallthru
      _
    // Predicated region
    $region30: #{tpu_custom_call.1} parent=1 // pred_check
      _
    $region31: #{tpu_custom_call.1} parent=1 // pred_check_branch
      %74 = sbr.rel (0) target = $region33
    $region32: #{tpu_custom_call.1} parent=1 // pred_region
      %s76 = ssub.s32 2048, 2048
      %77 = vsyncadd [#allocation9], %s76
      %s78 = sshll.u32 [#allocation10], 4
      %s79 = int_to_ptr.vmem [resolvable:$true] %s78
      %84 = dma.hbm_to_vmem [thread:$0]  %s7, 2048, %s79, [#allocation9], 128, 128, 8
    $region33: #{tpu_custom_call.1} parent=1 // pred_fallthru
      _
    // Predicated region
    $region34: #{tpu_custom_call.1} parent=1 // pred_check
      _
    $region35: #{tpu_custom_call.1} parent=1 // pred_check_branch
      %86 = sbr.rel (0) target = $region37
    $region36: #{tpu_custom_call.1} parent=1 // pred_region
      _
    $region37: #{tpu_custom_call.1} parent=1 // pred_fallthru
      _
    // Predicated region
    $region38: #{tpu_custom_call.1} parent=1 // pred_check
      _
    $region39: #{tpu_custom_call.1} parent=1 // pred_check_branch
      %88 = sbr.rel (0) target = $region41
    $region40: #{tpu_custom_call.1} parent=1 // pred_region
      %s90 = ssub.s32 2048, 2048
      %91 = vsyncadd [#allocation12], %s90
      %s92 = sshll.u32 [#allocation11], 4
      %s93 = int_to_ptr.vmem [resolvable:$true] %s92
      %98 = dma.hbm_to_vmem [thread:$0]  %s9, 2048, %s93, [#allocation12], 128, 128, 8
    $region41: #{tpu_custom_call.1} parent=1 // pred_fallthru
      _
    // Predicated region
    $region42: #{tpu_custom_call.1} parent=1 // pred_check
      _
    $region43: #{tpu_custom_call.1} parent=1 // pred_check_branch
      %100 = sbr.rel (0) target = $region45
    $region44: #{tpu_custom_call.1} parent=1 // pred_region
      _
    $region45: #{tpu_custom_call.1} parent=1 // pred_fallthru
      _
    // Predicated region
    $region46: #{tpu_custom_call.1} parent=1 // pred_check
      _
    $region47: #{tpu_custom_call.1} parent=1 // pred_check_branch
      %102 = sbr.rel (0) target = $region49
    $region48: #{tpu_custom_call.1} parent=1 // pred_region
      %103 = dma.done [#allocation3], 128
    $region49: #{tpu_custom_call.1} parent=1 // pred_fallthru
      _
    // Predicated region
    $region50: #{tpu_custom_call.1} parent=1 // pred_check
      _
    $region51: #{tpu_custom_call.1} parent=1 // pred_check_branch
      %105 = sbr.rel (0) target = $region53
    $region52: #{tpu_custom_call.1} parent=1 // pred_region
      %106 = dma.done [#allocation6], 256
    $region53: #{tpu_custom_call.1} parent=1 // pred_fallthru
      _
    // Predicated region
    $region54: #{tpu_custom_call.1} parent=1 // pred_check
      _
    $region55: #{tpu_custom_call.1} parent=1 // pred_check_branch
      %108 = sbr.rel (0) target = $region57
    $region56: #{tpu_custom_call.1} parent=1 // pred_region
      %109 = dma.done [#allocation6], 4096
    $region57: #{tpu_custom_call.1} parent=1 // pred_fallthru
      _
    // Predicated region
    $region58: #{tpu_custom_call.1} parent=1 // pred_check
      _
    $region59: #{tpu_custom_call.1} parent=1 // pred_check_branch
      %111 = sbr.rel (0) target = $region61
    $region60: #{tpu_custom_call.1} parent=1 // pred_region
      %112 = dma.done [#allocation9], 4096
    $region61: #{tpu_custom_call.1} parent=1 // pred_fallthru
      _
    // Predicated region
    $region62: #{tpu_custom_call.1} parent=1 // pred_check
      _
    $region63: #{tpu_custom_call.1} parent=1 // pred_check_branch
      %114 = sbr.rel (0) target = $region65
    $region64: #{tpu_custom_call.1} parent=1 // pred_region
      %115 = dma.done [#allocation9], 2048
    $region65: #{tpu_custom_call.1} parent=1 // pred_fallthru
      _
    // Predicated region
    $region66: #{tpu_custom_call.1} parent=1 // pred_check
      _
    $region67: #{tpu_custom_call.1} parent=1 // pred_check_branch
      %117 = sbr.rel (0) target = $region69
    $region68: #{tpu_custom_call.1} parent=1 // pred_region
      %118 = dma.done [#allocation12], 2048
    $region69: #{tpu_custom_call.1} parent=1 // pred_fallthru
      _
    %v119 = vld [vmem:[#allocation2] sm:$0xff]
    %v120 = vld [vmem:[#allocation5] sm:$0xff]
    %v121 = vld [vmem:[#allocation5 + $0x8] sm:$0xff]
    %v122 = vld [vmem:[%s2] sm:$0x1]
    %v124 = vlaneseq
    %v125 = vshrl.u32 %v124, 7
    %v126 = vsub.s32 0, %v125
    %v127 = vrot.slane %v122, %v126
    %vm129 = vcmask 130048
    %v131 = vsel %vm129, %v119, 0
    %133 = vmatprep.subr.mxu0 0.0
    %134 = vmatpush1.msra.mxu0 %v120
    %135 = vmatprep.subr.mxu0 0.0
    %136 = vmatpush1.msra.mxu0 %v121
    %137 = vmatprep.subr.mxu0 0.0
    %138 = vmatpush1.msra.mxu0 0.0
    %139 = vmatprep.subr.mxu0 0.0
    %140 = vmatpush1.msra.mxu0 0.0
    %141 = vmatprep.subr.mxu0 0.0
    %142 = vmatpush1.msra.mxu0 0.0
    %143 = vmatprep.subr.mxu0 0.0
    %144 = vmatpush1.msra.mxu0 0.0
    %145 = vmatprep.subr.mxu0 0.0
    %146 = vmatpush1.msra.mxu0 0.0
    %147 = vmatprep.subr.mxu0 0.0
    %148 = vmatpush1.msra.mxu0 0.0
    %149 = vmatprep.subr.mxu0 0.0
    %150 = vmatpush1.msra.mxu0 0.0
    %151 = vmatprep.subr.mxu0 0.0
    %152 = vmatpush1.msra.mxu0 0.0
    %153 = vmatprep.subr.mxu0 0.0
    %154 = vmatpush1.msra.mxu0 0.0
    %155 = vmatprep.subr.mxu0 0.0
    %156 = vmatpush1.msra.mxu0 0.0
    %157 = vmatprep.subr.mxu0 0.0
    %158 = vmatpush1.msra.mxu0 0.0
    %159 = vmatprep.subr.mxu0 0.0
    %160 = vmatpush1.msra.mxu0 0.0
    %161 = vmatprep.subr.mxu0 0.0
    %162 = vmatpush1.msra.mxu0 0.0
    %163 = vmatprep.subr.mxu0 0.0
    %164 = vmatpush1.msra.mxu0 0.0
    %165 = vmatprep.subr.mxu0 0.0
    %166 = vmatpush1.msra.mxu0 0.0
    %167 = vmatprep.subr.mxu0 0.0
    %168 = vmatpush1.msra.mxu0 0.0
    %169 = vmatprep.subr.mxu0 0.0
    %170 = vmatpush1.msra.mxu0 0.0
    %171 = vmatprep.subr.mxu0 0.0
    %172 = vmatpush1.msra.mxu0 0.0
    %173 = vmatprep.subr.mxu0 0.0
    %174 = vmatpush1.msra.mxu0 0.0
    %175 = vmatprep.subr.mxu0 0.0
    %176 = vmatpush1.msra.mxu0 0.0
    %177 = vmatprep.subr.mxu0 0.0
    %178 = vmatpush1.msra.mxu0 0.0
    %179 = vmatprep.subr.mxu0 0.0
    %180 = vmatpush1.msra.mxu0 0.0
    %181 = vmatprep.subr.mxu0 0.0
    %182 = vmatpush1.msra.mxu0 0.0
    %183 = vmatprep.subr.mxu0 0.0
    %184 = vmatpush1.msra.mxu0 0.0
    %185 = vmatprep.subr.mxu0 0.0
    %186 = vmatpush1.msra.mxu0 0.0
    %187 = vmatprep.subr.mxu0 0.0
    %188 = vmatpush1.msra.mxu0 0.0
    %189 = vmatprep.subr.mxu0 0.0
    %190 = vmatpush1.msra.mxu0 0.0
    %191 = vmatprep.subr.mxu0 0.0
    %192 = vmatpush1.msra.mxu0 0.0
    %193 = vmatprep.subr.mxu0 0.0
    %194 = vmatpush1.msra.mxu0 0.0
    %195 = vmatprep.subr.mxu0 0.0
    %196 = vmatpush1.msra.mxu0 0.0
    %197 = vmatprep.mubr.f32.mxu0 0.0
    %198 = vmatmul.mubr.f32.gmra.mrb[0].mxu0 %v131
    %v199 = vpop.f32.mrb[0].mxu0
    %v200 = vadd.f32 %v127, %v199
    %v201 = vpop.f32.mrb[0].mxu0
    %202 = vdwg.mxu0
    %v203 = vmax.f32 %v200, 0.0
    %v204 = vld [vmem:[#allocation7] sm:$0xff]
    %v205 = vld [vmem:[#allocation7 + $0x8] sm:$0xff]
    %v206 = vld [vmem:[#allocation7 + $0x10] sm:$0xff]
    %v207 = vld [vmem:[#allocation7 + $0x18] sm:$0xff]
    %v208 = vld [vmem:[#allocation7 + $0x20] sm:$0xff]
    %v209 = vld [vmem:[#allocation7 + $0x28] sm:$0xff]
    %v210 = vld [vmem:[#allocation7 + $0x30] sm:$0xff]
    %v211 = vld [vmem:[#allocation7 + $0x38] sm:$0xff]
    %v212 = vld [vmem:[#allocation7 + $0x40] sm:$0xff]
    %v213 = vld [vmem:[#allocation7 + $0x48] sm:$0xff]
    %v214 = vld [vmem:[#allocation7 + $0x50] sm:$0xff]
    %v215 = vld [vmem:[#allocation7 + $0x58] sm:$0xff]
    %v216 = vld [vmem:[#allocation7 + $0x60] sm:$0xff]
    %v217 = vld [vmem:[#allocation7 + $0x68] sm:$0xff]
    %v218 = vld [vmem:[#allocation7 + $0x70] sm:$0xff]
    %v219 = vld [vmem:[#allocation7 + $0x78] sm:$0xff]
    %v220 = vld [vmem:[#allocation7 + $0x80] sm:$0xff]
    %v221 = vld [vmem:[#allocation7 + $0x88] sm:$0xff]
    %v222 = vld [vmem:[#allocation7 + $0x90] sm:$0xff]
    %v223 = vld [vmem:[#allocation7 + $0x98] sm:$0xff]
    %v224 = vld [vmem:[#allocation7 + $0xa0] sm:$0xff]
    %v225 = vld [vmem:[#allocation7 + $0xa8] sm:$0xff]
    %v226 = vld [vmem:[#allocation7 + $0xb0] sm:$0xff]
    %v227 = vld [vmem:[#allocation7 + $0xb8] sm:$0xff]
    %v228 = vld [vmem:[#allocation7 + $0xc0] sm:$0xff]
    %v229 = vld [vmem:[#allocation7 + $0xc8] sm:$0xff]
    %v230 = vld [vmem:[#allocation7 + $0xd0] sm:$0xff]
    %v231 = vld [vmem:[#allocation7 + $0xd8] sm:$0xff]
    %v232 = vld [vmem:[#allocation7 + $0xe0] sm:$0xff]
    %v233 = vld [vmem:[#allocation7 + $0xe8] sm:$0xff]
    %v234 = vld [vmem:[#allocation7 + $0xf0] sm:$0xff]
    %v235 = vld [vmem:[#allocation7 + $0xf8] sm:$0xff]
    %v236 = vld [vmem:[%s4] sm:$0x3]
    %v238 = vlaneseq
    %v239 = vshrl.u32 %v238, 7
    %v240 = vsub.s32 0, %v239
    %v241 = vrot.slane %v236, %v240
    %v242 = vlaneseq
    %v243 = vshrl.u32 %v242, 7
    %v244 = vsub.s32 1, %v243
    %v245 = vrot.slane %v236, %v244
    %248 = vmatprep.subr.mxu0 %v205
    %249 = vmatpush1.msra.mxu0 %v204
    %250 = vmatprep.subr.mxu0 %v207
    %251 = vmatpush1.msra.mxu0 %v206
    %252 = vmatprep.subr.mxu0 %v209
    %253 = vmatpush1.msra.mxu0 %v208
    %254 = vmatprep.subr.mxu0 %v211
    %255 = vmatpush1.msra.mxu0 %v210
    %256 = vmatprep.subr.mxu0 %v213
    %257 = vmatpush1.msra.mxu0 %v212
    %258 = vmatprep.subr.mxu0 %v215
    %259 = vmatpush1.msra.mxu0 %v214
    %260 = vmatprep.subr.mxu0 %v217
    %261 = vmatpush1.msra.mxu0 %v216
    %262 = vmatprep.subr.mxu0 %v219
    %263 = vmatpush1.msra.mxu0 %v218
    %264 = vmatprep.subr.mxu0 %v221
    %265 = vmatpush1.msra.mxu0 %v220
    %266 = vmatprep.subr.mxu0 %v223
    %267 = vmatpush1.msra.mxu0 %v222
    %268 = vmatprep.subr.mxu0 %v225
    %269 = vmatpush1.msra.mxu0 %v224
    %270 = vmatprep.subr.mxu0 %v227
    %271 = vmatpush1.msra.mxu0 %v226
    %272 = vmatprep.subr.mxu0 %v229
    %273 = vmatpush1.msra.mxu0 %v228
    %274 = vmatprep.subr.mxu0 %v231
    %275 = vmatpush1.msra.mxu0 %v230
    %276 = vmatprep.subr.mxu0 %v233
    %277 = vmatpush1.msra.mxu0 %v232
    %278 = vmatprep.subr.mxu0 %v235
    %279 = vmatpush1.msra.mxu0 %v234
    %280 = vmatprep.subr.mxu0 0.0
    %281 = vmatpush1.msra.mxu0 0.0
    %282 = vmatprep.subr.mxu0 0.0
    %283 = vmatpush1.msra.mxu0 0.0
    %284 = vmatprep.subr.mxu0 0.0
    %285 = vmatpush1.msra.mxu0 0.0
    %286 = vmatprep.subr.mxu0 0.0
    %287 = vmatpush1.msra.mxu0 0.0
    %288 = vmatprep.subr.mxu0 0.0
    %289 = vmatpush1.msra.mxu0 0.0
    %290 = vmatprep.subr.mxu0 0.0
    %291 = vmatpush1.msra.mxu0 0.0
    %292 = vmatprep.subr.mxu0 0.0
    %293 = vmatpush1.msra.mxu0 0.0
    %294 = vmatprep.subr.mxu0 0.0
    %295 = vmatpush1.msra.mxu0 0.0
    %296 = vmatprep.subr.mxu0 0.0
    %297 = vmatpush1.msra.mxu0 0.0
    %298 = vmatprep.subr.mxu0 0.0
    %299 = vmatpush1.msra.mxu0 0.0
    %300 = vmatprep.subr.mxu0 0.0
    %301 = vmatpush1.msra.mxu0 0.0
    %302 = vmatprep.subr.mxu0 0.0
    %303 = vmatpush1.msra.mxu0 0.0
    %304 = vmatprep.subr.mxu0 0.0
    %305 = vmatpush1.msra.mxu0 0.0
    %306 = vmatprep.subr.mxu0 0.0
    %307 = vmatpush1.msra.mxu0 0.0
    %308 = vmatprep.subr.mxu0 0.0
    %309 = vmatpush1.msra.mxu0 0.0
    %310 = vmatprep.subr.mxu0 0.0
    %311 = vmatpush1.msra.mxu0 0.0
    %312 = vmatprep.mubr.f32.mxu0 0.0
    %313 = vmatmul.mubr.f32.gmra.mrb[0].mxu0 %v203
    %v314 = vpop.f32.mrb[0].mxu0
    %v315 = vadd.f32 %v241, %v314
    %v316 = vpop.f32.mrb[0].mxu0
    %v317 = vadd.f32 %v245, %v316
    %318 = vdwg.mxu0
    %v319 = vmul.f32 %v315, 0.5
    %v320 = vmul.f32 %v317, 0.5
    %v321 = vtanh.pop %v319
    %v322 = vtanh.pop %v320
    %v323 = vadd.f32 %v321, 1.0
    %v324 = vadd.f32 %v322, 1.0
    %v325 = vmul.f32 %v323, 0.5
    %v326 = vmul.f32 %v324, 0.5
    %v327 = vld [vmem:[#allocation8] sm:$0xff]
    %v328 = vld [vmem:[#allocation8 + $0x8] sm:$0xff]
    %v329 = vld [vmem:[#allocation8 + $0x10] sm:$0xff]
    %v330 = vld [vmem:[#allocation8 + $0x18] sm:$0xff]
    %v331 = vld [vmem:[#allocation8 + $0x20] sm:$0xff]
    %v332 = vld [vmem:[#allocation8 + $0x28] sm:$0xff]
    %v333 = vld [vmem:[#allocation8 + $0x30] sm:$0xff]
    %v334 = vld [vmem:[#allocation8 + $0x38] sm:$0xff]
    %v335 = vld [vmem:[#allocation8 + $0x40] sm:$0xff]
    %v336 = vld [vmem:[#allocation8 + $0x48] sm:$0xff]
    %v337 = vld [vmem:[#allocation8 + $0x50] sm:$0xff]
    %v338 = vld [vmem:[#allocation8 + $0x58] sm:$0xff]
    %v339 = vld [vmem:[#allocation8 + $0x60] sm:$0xff]
    %v340 = vld [vmem:[#allocation8 + $0x68] sm:$0xff]
    %v341 = vld [vmem:[#allocation8 + $0x70] sm:$0xff]
    %v342 = vld [vmem:[#allocation8 + $0x78] sm:$0xff]
    %v343 = vld [vmem:[#allocation8 + $0x80] sm:$0xff]
    %v344 = vld [vmem:[#allocation8 + $0x88] sm:$0xff]
    %v345 = vld [vmem:[#allocation8 + $0x90] sm:$0xff]
    %v346 = vld [vmem:[#allocation8 + $0x98] sm:$0xff]
    %v347 = vld [vmem:[#allocation8 + $0xa0] sm:$0xff]
    %v348 = vld [vmem:[#allocation8 + $0xa8] sm:$0xff]
    %v349 = vld [vmem:[#allocation8 + $0xb0] sm:$0xff]
    %v350 = vld [vmem:[#allocation8 + $0xb8] sm:$0xff]
    %v351 = vld [vmem:[#allocation8 + $0xc0] sm:$0xff]
    %v352 = vld [vmem:[#allocation8 + $0xc8] sm:$0xff]
    %v353 = vld [vmem:[#allocation8 + $0xd0] sm:$0xff]
    %v354 = vld [vmem:[#allocation8 + $0xd8] sm:$0xff]
    %v355 = vld [vmem:[#allocation8 + $0xe0] sm:$0xff]
    %v356 = vld [vmem:[#allocation8 + $0xe8] sm:$0xff]
    %v357 = vld [vmem:[#allocation8 + $0xf0] sm:$0xff]
    %v358 = vld [vmem:[#allocation8 + $0xf8] sm:$0xff]
    %v359 = vld [vmem:[%s6] sm:$0x1]
    %v361 = vlaneseq
    %v362 = vshrl.u32 %v361, 7
    %v363 = vsub.s32 0, %v362
    %v364 = vrot.slane %v359, %v363
    %366 = vmatprep.subr.mxu0 0.0
    %367 = vmatpush1.msra.mxu0 %v327
    %368 = vmatprep.subr.mxu0 0.0
    %369 = vmatpush1.msra.mxu0 %v328
    %370 = vmatprep.subr.mxu0 0.0
    %371 = vmatpush1.msra.mxu0 %v329
    %372 = vmatprep.subr.mxu0 0.0
    %373 = vmatpush1.msra.mxu0 %v330
    %374 = vmatprep.subr.mxu0 0.0
    %375 = vmatpush1.msra.mxu0 %v331
    %376 = vmatprep.subr.mxu0 0.0
    %377 = vmatpush1.msra.mxu0 %v332
    %378 = vmatprep.subr.mxu0 0.0
    %379 = vmatpush1.msra.mxu0 %v333
    %380 = vmatprep.subr.mxu0 0.0
    %381 = vmatpush1.msra.mxu0 %v334
    %382 = vmatprep.subr.mxu0 0.0
    %383 = vmatpush1.msra.mxu0 %v335
    %384 = vmatprep.subr.mxu0 0.0
    %385 = vmatpush1.msra.mxu0 %v336
    %386 = vmatprep.subr.mxu0 0.0
    %387 = vmatpush1.msra.mxu0 %v337
    %388 = vmatprep.subr.mxu0 0.0
    %389 = vmatpush1.msra.mxu0 %v338
    %390 = vmatprep.subr.mxu0 0.0
    %391 = vmatpush1.msra.mxu0 %v339
    %392 = vmatprep.subr.mxu0 0.0
    %393 = vmatpush1.msra.mxu0 %v340
    %394 = vmatprep.subr.mxu0 0.0
    %395 = vmatpush1.msra.mxu0 %v341
    %396 = vmatprep.subr.mxu0 0.0
    %397 = vmatpush1.msra.mxu0 %v342
    %398 = vmatprep.subr.mxu0 0.0
    %399 = vmatpush1.msra.mxu0 %v343
    %400 = vmatprep.subr.mxu0 0.0
    %401 = vmatpush1.msra.mxu0 %v344
    %402 = vmatprep.subr.mxu0 0.0
    %403 = vmatpush1.msra.mxu0 %v345
    %404 = vmatprep.subr.mxu0 0.0
    %405 = vmatpush1.msra.mxu0 %v346
    %406 = vmatprep.subr.mxu0 0.0
    %407 = vmatpush1.msra.mxu0 %v347
    %408 = vmatprep.subr.mxu0 0.0
    %409 = vmatpush1.msra.mxu0 %v348
    %410 = vmatprep.subr.mxu0 0.0
    %411 = vmatpush1.msra.mxu0 %v349
    %412 = vmatprep.subr.mxu0 0.0
    %413 = vmatpush1.msra.mxu0 %v350
    %414 = vmatprep.subr.mxu0 0.0
    %415 = vmatpush1.msra.mxu0 %v351
    %416 = vmatprep.subr.mxu0 0.0
    %417 = vmatpush1.msra.mxu0 %v352
    %418 = vmatprep.subr.mxu0 0.0
    %419 = vmatpush1.msra.mxu0 %v353
    %420 = vmatprep.subr.mxu0 0.0
    %421 = vmatpush1.msra.mxu0 %v354
    %422 = vmatprep.subr.mxu0 0.0
    %423 = vmatpush1.msra.mxu0 %v355
    %424 = vmatprep.subr.mxu0 0.0
    %425 = vmatpush1.msra.mxu0 %v356
    %426 = vmatprep.subr.mxu0 0.0
    %427 = vmatpush1.msra.mxu0 %v357
    %428 = vmatprep.subr.mxu0 0.0
    %429 = vmatpush1.msra.mxu0 %v358
    %430 = vmatprep.mubr.f32.mxu0 %v326
    %431 = vmatmul.mubr.f32.gmra.mrb[0].mxu0 %v325
    %v432 = vpop.f32.mrb[0].mxu0
    %v433 = vadd.f32 %v364, %v432
    %v434 = vpop.f32.mrb[0].mxu0
    %435 = vdwg.mxu0
    %v436 = vmul.f32 %v433, 0.5
    %v437 = vtanh.pop %v436
    %v438 = vadd.f32 %v437, 1.0
    %v439 = vmul.f32 %v438, 0.5
    %v440 = vld [vmem:[#allocation10] sm:$0xff]
    %v441 = vld [vmem:[#allocation10 + $0x8] sm:$0xff]
    %v442 = vld [vmem:[#allocation10 + $0x10] sm:$0xff]
    %v443 = vld [vmem:[#allocation10 + $0x18] sm:$0xff]
    %v444 = vld [vmem:[#allocation10 + $0x20] sm:$0xff]
    %v445 = vld [vmem:[#allocation10 + $0x28] sm:$0xff]
    %v446 = vld [vmem:[#allocation10 + $0x30] sm:$0xff]
    %v447 = vld [vmem:[#allocation10 + $0x38] sm:$0xff]
    %v448 = vld [vmem:[#allocation10 + $0x40] sm:$0xff]
    %v449 = vld [vmem:[#allocation10 + $0x48] sm:$0xff]
    %v450 = vld [vmem:[#allocation10 + $0x50] sm:$0xff]
    %v451 = vld [vmem:[#allocation10 + $0x58] sm:$0xff]
    %v452 = vld [vmem:[#allocation10 + $0x60] sm:$0xff]
    %v453 = vld [vmem:[#allocation10 + $0x68] sm:$0xff]
    %v454 = vld [vmem:[#allocation10 + $0x70] sm:$0xff]
    %v455 = vld [vmem:[#allocation10 + $0x78] sm:$0xff]
    %v456 = vld [vmem:[%s8] sm:$0x1]
    %v458 = vlaneseq
    %v459 = vshrl.u32 %v458, 7
    %v460 = vsub.s32 0, %v459
    %v461 = vrot.slane %v456, %v460
    %463 = vmatprep.subr.mxu0 0.0
    %464 = vmatpush1.msra.mxu0 %v440
    %465 = vmatprep.subr.mxu0 0.0
    %466 = vmatpush1.msra.mxu0 %v441
    %467 = vmatprep.subr.mxu0 0.0
    %468 = vmatpush1.msra.mxu0 %v442
    %469 = vmatprep.subr.mxu0 0.0
    %470 = vmatpush1.msra.mxu0 %v443
    %471 = vmatprep.subr.mxu0 0.0
    %472 = vmatpush1.msra.mxu0 %v444
    %473 = vmatprep.subr.mxu0 0.0
    %474 = vmatpush1.msra.mxu0 %v445
    %475 = vmatprep.subr.mxu0 0.0
    %476 = vmatpush1.msra.mxu0 %v446
    %477 = vmatprep.subr.mxu0 0.0
    %478 = vmatpush1.msra.mxu0 %v447
    %479 = vmatprep.subr.mxu0 0.0
    %480 = vmatpush1.msra.mxu0 %v448
    %481 = vmatprep.subr.mxu0 0.0
    %482 = vmatpush1.msra.mxu0 %v449
    %483 = vmatprep.subr.mxu0 0.0
    %484 = vmatpush1.msra.mxu0 %v450
    %485 = vmatprep.subr.mxu0 0.0
    %486 = vmatpush1.msra.mxu0 %v451
    %487 = vmatprep.subr.mxu0 0.0
    %488 = vmatpush1.msra.mxu0 %v452
    %489 = vmatprep.subr.mxu0 0.0
    %490 = vmatpush1.msra.mxu0 %v453
    %491 = vmatprep.subr.mxu0 0.0
    %492 = vmatpush1.msra.mxu0 %v454
    %493 = vmatprep.subr.mxu0 0.0
    %494 = vmatpush1.msra.mxu0 %v455
    %495 = vmatprep.subr.mxu0 0.0
    %496 = vmatpush1.msra.mxu0 0.0
    %497 = vmatprep.subr.mxu0 0.0
    %498 = vmatpush1.msra.mxu0 0.0
    %499 = vmatprep.subr.mxu0 0.0
    %500 = vmatpush1.msra.mxu0 0.0
    %501 = vmatprep.subr.mxu0 0.0
    %502 = vmatpush1.msra.mxu0 0.0
    %503 = vmatprep.subr.mxu0 0.0
    %504 = vmatpush1.msra.mxu0 0.0
    %505 = vmatprep.subr.mxu0 0.0
    %506 = vmatpush1.msra.mxu0 0.0
    %507 = vmatprep.subr.mxu0 0.0
    %508 = vmatpush1.msra.mxu0 0.0
    %509 = vmatprep.subr.mxu0 0.0
    %510 = vmatpush1.msra.mxu0 0.0
    %511 = vmatprep.subr.mxu0 0.0
    %512 = vmatpush1.msra.mxu0 0.0
    %513 = vmatprep.subr.mxu0 0.0
    %514 = vmatpush1.msra.mxu0 0.0
    %515 = vmatprep.subr.mxu0 0.0
    %516 = vmatpush1.msra.mxu0 0.0
    %517 = vmatprep.subr.mxu0 0.0
    %518 = vmatpush1.msra.mxu0 0.0
    %519 = vmatprep.subr.mxu0 0.0
    %520 = vmatpush1.msra.mxu0 0.0
    %521 = vmatprep.subr.mxu0 0.0
    %522 = vmatpush1.msra.mxu0 0.0
    %523 = vmatprep.subr.mxu0 0.0
    %524 = vmatpush1.msra.mxu0 0.0
    %525 = vmatprep.subr.mxu0 0.0
    %526 = vmatpush1.msra.mxu0 0.0
    %527 = vmatprep.mubr.f32.mxu0 0.0
    %528 = vmatmul.mubr.f32.gmra.mrb[0].mxu0 %v439
    %v529 = vpop.f32.mrb[0].mxu0
    %v530 = vadd.f32 %v461, %v529
    %v531 = vpop.f32.mrb[0].mxu0
    %532 = vdwg.mxu0
    %v533 = vmax.f32 %v530, 0.0
    %v534 = vld [vmem:[#allocation11] sm:$0xff]
    %v535 = vld [vmem:[#allocation11 + $0x8] sm:$0xff]
    %v536 = vld [vmem:[#allocation11 + $0x10] sm:$0xff]
    %v537 = vld [vmem:[#allocation11 + $0x18] sm:$0xff]
    %v538 = vld [vmem:[#allocation11 + $0x20] sm:$0xff]
    %v539 = vld [vmem:[#allocation11 + $0x28] sm:$0xff]
    %v540 = vld [vmem:[#allocation11 + $0x30] sm:$0xff]
    %v541 = vld [vmem:[#allocation11 + $0x38] sm:$0xff]
    %v542 = vld [vmem:[#allocation11 + $0x40] sm:$0xff]
    %v543 = vld [vmem:[#allocation11 + $0x48] sm:$0xff]
    %v544 = vld [vmem:[#allocation11 + $0x50] sm:$0xff]
    %v545 = vld [vmem:[#allocation11 + $0x58] sm:$0xff]
    %v546 = vld [vmem:[#allocation11 + $0x60] sm:$0xff]
    %v547 = vld [vmem:[#allocation11 + $0x68] sm:$0xff]
    %v548 = vld [vmem:[#allocation11 + $0x70] sm:$0xff]
    %v549 = vld [vmem:[#allocation11 + $0x78] sm:$0xff]
    %v550 = vld [vmem:[%s10] sm:$0x1]
    %v552 = vlaneseq
    %v553 = vshrl.u32 %v552, 7
    %v554 = vsub.s32 0, %v553
    %v555 = vrot.slane %v550, %v554
    %557 = vmatprep.subr.mxu0 0.0
    %558 = vmatpush1.msra.mxu0 %v534
    %559 = vmatprep.subr.mxu0 0.0
    %560 = vmatpush1.msra.mxu0 %v535
    %561 = vmatprep.subr.mxu0 0.0
    %562 = vmatpush1.msra.mxu0 %v536
    %563 = vmatprep.subr.mxu0 0.0
    %564 = vmatpush1.msra.mxu0 %v537
    %565 = vmatprep.subr.mxu0 0.0
    %566 = vmatpush1.msra.mxu0 %v538
    %567 = vmatprep.subr.mxu0 0.0
    %568 = vmatpush1.msra.mxu0 %v539
    %569 = vmatprep.subr.mxu0 0.0
    %570 = vmatpush1.msra.mxu0 %v540
    %571 = vmatprep.subr.mxu0 0.0
    %572 = vmatpush1.msra.mxu0 %v541
    %573 = vmatprep.subr.mxu0 0.0
    %574 = vmatpush1.msra.mxu0 %v542
    %575 = vmatprep.subr.mxu0 0.0
    %576 = vmatpush1.msra.mxu0 %v543
    %577 = vmatprep.subr.mxu0 0.0
    %578 = vmatpush1.msra.mxu0 %v544
    %579 = vmatprep.subr.mxu0 0.0
    %580 = vmatpush1.msra.mxu0 %v545
    %581 = vmatprep.subr.mxu0 0.0
    %582 = vmatpush1.msra.mxu0 %v546
    %583 = vmatprep.subr.mxu0 0.0
    %584 = vmatpush1.msra.mxu0 %v547
    %585 = vmatprep.subr.mxu0 0.0
    %586 = vmatpush1.msra.mxu0 %v548
    %587 = vmatprep.subr.mxu0 0.0
    %588 = vmatpush1.msra.mxu0 %v549
    %589 = vmatprep.subr.mxu0 0.0
    %590 = vmatpush1.msra.mxu0 0.0
    %591 = vmatprep.subr.mxu0 0.0
    %592 = vmatpush1.msra.mxu0 0.0
    %593 = vmatprep.subr.mxu0 0.0
    %594 = vmatpush1.msra.mxu0 0.0
    %595 = vmatprep.subr.mxu0 0.0
    %596 = vmatpush1.msra.mxu0 0.0
    %597 = vmatprep.subr.mxu0 0.0
    %598 = vmatpush1.msra.mxu0 0.0
    %599 = vmatprep.subr.mxu0 0.0
    %600 = vmatpush1.msra.mxu0 0.0
    %601 = vmatprep.subr.mxu0 0.0
    %602 = vmatpush1.msra.mxu0 0.0
    %603 = vmatprep.subr.mxu0 0.0
    %604 = vmatpush1.msra.mxu0 0.0
    %605 = vmatprep.subr.mxu0 0.0
    %606 = vmatpush1.msra.mxu0 0.0
    %607 = vmatprep.subr.mxu0 0.0
    %608 = vmatpush1.msra.mxu0 0.0
    %609 = vmatprep.subr.mxu0 0.0
    %610 = vmatpush1.msra.mxu0 0.0
    %611 = vmatprep.subr.mxu0 0.0
    %612 = vmatpush1.msra.mxu0 0.0
    %613 = vmatprep.subr.mxu0 0.0
    %614 = vmatpush1.msra.mxu0 0.0
    %615 = vmatprep.subr.mxu0 0.0
    %616 = vmatpush1.msra.mxu0 0.0
    %617 = vmatprep.subr.mxu0 0.0
    %618 = vmatpush1.msra.mxu0 0.0
    %619 = vmatprep.subr.mxu0 0.0
    %620 = vmatpush1.msra.mxu0 0.0
    %621 = vmatprep.mubr.f32.mxu0 0.0
    %622 = vmatmul.mubr.f32.gmra.mrb[0].mxu0 %v533
    %v623 = vpop.f32.mrb[0].mxu0
    %v624 = vadd.f32 %v555, %v623
    %v625 = vpop.f32.mrb[0].mxu0
    %626 = vdwg.mxu0
    %627 = vst [vmem:[#allocation13] sm:$0xff] %v624
    // Predicated region
    $region70: #{tpu_custom_call.1} parent=1 // pred_check
      _
    $region71: #{tpu_custom_call.1} parent=1 // pred_check_branch
      %629 = sbr.rel (0) target = $region73
    $region72: #{tpu_custom_call.1} parent=1 // pred_region
      %s631 = ssub.s32 128, 128
      %632 = vsyncadd [#allocation4], %s631
      %s634 = sshll.u32 [#allocation13], 4
      %s635 = int_to_ptr.vmem [resolvable:$true] %s634
      %637 = dma.vmem_to_hbm [thread:$0]  %s635, 128, %s11, [#allocation4]
    $region73: #{tpu_custom_call.1} parent=1 // pred_fallthru
      _
    // Predicated region
    $region74: #{tpu_custom_call.1} parent=1 // pred_check
      _
    $region75: #{tpu_custom_call.1} parent=1 // pred_check_branch
      %639 = sbr.rel (0) target = $region77
    $region76: #{tpu_custom_call.1} parent=1 // pred_region
      %640 = dma.done [#allocation4], 128
    $region77: #{tpu_custom_call.1} parent=1 // pred_fallthru
      _
    %641 = vsyncpa [#allocation3], 1
    %642 = vsyncpa [#allocation6], 1
    %643 = vsyncpa [#allocation9], 1
    %644 = vsyncpa [#allocation12], 1
    %645 = vsyncpa [#allocation4], 1

</llo_original>
